<compile_context>
chip_gen: v7x
topology: tpu7x:2x2x1
jax: 0.10.0
libtpu: 0.0.40
codegen_flags: <defaults>
</compile_context>

<pallas_src>
import jax
import jax.numpy as jnp
from jax.experimental import pallas as pl
from jax.experimental.pallas import tpu as pltpu


def _round_up(x, m):
    return (x + m - 1) // m * m


def _make_bigram_kernel(tn, vp, n_valid, compute_loss):
    """Kernel body.

    tn:      rows (tokens) per grid step (multiple of 8, static)
    vp:      padded vocab size (multiple of 128, static) -- also padded table rows
    n_valid: true number of tokens N = B*T (static)
    """

    if compute_loss:

        def kernel(idx_ref, tgt_ref, table_ref, logits_ref, partial_ref):
            tok = idx_ref[...]                                        # (TN, 1) i32
            cols = jax.lax.broadcasted_iota(jnp.int32, (tn, vp), 1)   # (TN, Vp)

            # Embedding lookup as a one-hot matmul on the MXU.
            one_hot = (cols == tok).astype(jnp.float32)               # (TN, Vp)
            logits = jnp.dot(one_hot, table_ref[...],
                             preferred_element_type=jnp.float32)      # (TN, Vp)
            logits_ref[...] = logits.astype(logits_ref.dtype)         # lane-dense

            # Vectorized target one-hot (single broadcasted compare).
            tgt = tgt_ref[...]                                        # (TN, 1) i32
            onehot_t = (cols == tgt).astype(jnp.float32)              # (TN, Vp)

            # Numerically-stable cross-entropy; padded columns are -1e30 so
            # exp(shifted) == 0 there and they never win the max.
            row_max = jnp.max(logits, axis=-1, keepdims=True)         # (TN, 1)
            lse = jnp.log(jnp.sum(jnp.exp(logits - row_max),
                                  axis=-1, keepdims=True)) + row_max  # (TN, 1)
            tgt_logit = jnp.sum(logits * onehot_t, axis=-1, keepdims=True)
            per_row = lse - tgt_logit                                 # (TN, 1)

            # Mask rows padded past the true N, emit a per-tile partial sum.
            base = pl.program_id(0) * tn
            rid = base + jax.lax.broadcasted_iota(jnp.int32, (tn, 1), 0)
            valid = (rid < n_valid).astype(jnp.float32)
            psum = jnp.sum(per_row * valid)                           # scalar
            partial_ref[...] = jnp.broadcast_to(psum, (8, 128)).astype(jnp.float32)

        return kernel

    else:

        def kernel(idx_ref, table_ref, logits_ref):
            tok = idx_ref[...]                                        # (TN, 1) i32
            cols = jax.lax.broadcasted_iota(jnp.int32, (tn, vp), 1)
            one_hot = (cols == tok).astype(jnp.float32)
            logits_ref[...] = jnp.dot(
                one_hot, table_ref[...],
                preferred_element_type=jnp.float32).astype(logits_ref.dtype)

        return kernel


def bigram_forward(idx, table, targets=None, *, tile_rows=2048,
                   logits_dtype=jnp.float32):
    """idx: (B, T) int32, table: (V, V) float32, targets: optional (B, T) int32.

    Returns (logits (B, T, V), loss () float32 or None) with the same forward
    semantics as BigramLanguageModel.forward.
    """
    B, T = idx.shape
    V = table.shape[0]
    N = B * T
    compute_loss = targets is not None

    # ---- Geometry -----------------------------------------------------------
    Vp = max(128, _round_up(V, 128))          # lane-dense vocab (cols AND rows)

    # Row tile: multiple of 8, bounded by a VMEM budget (double-buffered logits
    # block + compute scratch) and by the (padded) token count.
    vmem_budget_for_tiles = 20 * 1024 * 1024
    max_tn_by_vmem = max(8, (vmem_budget_for_tiles // (4 * Vp * 4)) // 8 * 8)
    TN = max(8, min(_round_up(tile_rows, 8), max_tn_by_vmem, _round_up(N, 8)))
    Np = _round_up(N, TN)
    n_tiles = Np // TN

    # ---- Operand preparation ------------------------------------------------
    # Pad table to (Vp, Vp): real block top-left, everything else -1e30 so
    # padded columns contribute exactly 0 to the softmax denominator; padded
    # rows are never selected by a valid one-hot (and 0 * -1e30 == 0 exactly).
    table_p = jnp.full((Vp, Vp), -1e30, dtype=jnp.float32)
    table_p = table_p.at[:V, :V].set(table.astype(jnp.float32))

    # Token ids as a lane-narrow column; pad rows with token 0 (masked later).
    idx_col = jnp.zeros((Np, 1), jnp.int32).at[:N, 0].set(
        idx.reshape(-1).astype(jnp.int32))

    # ---- Specs --------------------------------------------------------------
    idx_spec = pl.BlockSpec((TN, 1), lambda i: (i, 0))
    table_spec = pl.BlockSpec((Vp, Vp), lambda i: (0, 0),
                              pipeline_mode=pl.Buffered(1))   # resident, 1-buffer
    logits_spec = pl.BlockSpec((TN, Vp), lambda i: (i, 0))
    partial_spec = pl.BlockSpec((8, 128), lambda i: (i, 0))

    compiler_params = pltpu.CompilerParams(
        dimension_semantics=("parallel",),          # fully parallel tile axis
        vmem_limit_bytes=48 * 1024 * 1024,          # safe on v5e/v6e/v7x
    )

    # Advisory cost estimate (memory-bound on the logits writeback).
    flops = 2 * Np * Vp * Vp
    transcendentals = 0
    bytes_accessed = Vp * Vp * 4 + Np * 4 + Np * Vp * 4
    if compute_loss:
        flops += 6 * Np * Vp
        transcendentals = Np * Vp + Np
        bytes_accessed += Np * 4 + n_tiles * 8 * 128 * 4
    cost = pl.CostEstimate(flops=flops, transcendentals=transcendentals,
                           bytes_accessed=bytes_accessed)

    # ---- Dispatch -----------------------------------------------------------
    if compute_loss:
        tgt_col = jnp.zeros((Np, 1), jnp.int32).at[:N, 0].set(
            targets.reshape(-1).astype(jnp.int32))

        kernel = _make_bigram_kernel(TN, Vp, N, compute_loss=True)
        logits_p, partials = pl.pallas_call(
            kernel,
            out_shape=(
                jax.ShapeDtypeStruct((Np, Vp), logits_dtype),
                jax.ShapeDtypeStruct((n_tiles * 8, 128), jnp.float32),
            ),
            grid=(n_tiles,),
            in_specs=[idx_spec, idx_spec, table_spec],
            out_specs=(logits_spec, partial_spec),
            compiler_params=compiler_params,
            cost_estimate=cost,
        )(idx_col, tgt_col, table_p)

        # Finalize the mean in the wrapper (tiny): one scalar per tile.
        loss = jnp.sum(partials.reshape(n_tiles, 8, 128)[:, 0, 0]) / jnp.float32(N)
    else:
        kernel = _make_bigram_kernel(TN, Vp, N, compute_loss=False)
        logits_p = pl.pallas_call(
            kernel,
            out_shape=jax.ShapeDtypeStruct((Np, Vp), logits_dtype),
            grid=(n_tiles,),
            in_specs=[idx_spec, table_spec],
            out_specs=logits_spec,
            compiler_params=compiler_params,
            cost_estimate=cost,
        )(idx_col, table_p)
        loss = None

    # Trim only when padding was actually added (avoids an extra HBM copy of
    # the largest array when Vp == V and TN | N).
    if Np == N and Vp == V:
        logits = logits_p.reshape(B, T, V)
    else:
        logits = logits_p[:N, :V].reshape(B, T, V)
    return logits, loss


if __name__ == "__main__":
    # Deterministic "dataset" / vocab, mimicking `chars = sorted(set(text))`.
    text = "hello world! this is a tiny bigram language model test."
    chars = sorted(list(set(text)))
    vocab_size = len(chars)

    B, T = 2, 8
    key = jax.random.PRNGKey(0)
    k_table, k_idx, k_tgt = jax.random.split(key, 3)

    # nn.Embedding default init ~ N(0, 1).
    table = jax.random.normal(k_table, (vocab_size, vocab_size), dtype=jnp.float32)
    idx = jax.random.randint(k_idx, (B, T), 0, vocab_size, dtype=jnp.int32)
    targets = jax.random.randint(k_tgt, (B, T), 0, vocab_size, dtype=jnp.int32)

    logits, loss = bigram_forward(idx, table, targets)
    logits = jax.block_until_ready(logits)
    loss = jax.block_until_ready(loss)

    # Pure-JAX reference check.
    ref_logits = table[idx]                                   # (B, T, V)
    flat = ref_logits.reshape(B * T, vocab_size)
    lse = jax.nn.logsumexp(flat, axis=-1)
    ref_loss = jnp.mean(lse - flat[jnp.arange(B * T), targets.reshape(-1)])
    assert jnp.allclose(logits, ref_logits, atol=1e-5), "logits mismatch"
    assert jnp.allclose(loss, ref_loss, atol=1e-5), "loss mismatch"

    # Also exercise the targets=None (loss-free) path.
    logits_only, none_loss = bigram_forward(idx, table, None)
    jax.block_until_ready(logits_only)
    assert none_loss is None
    assert jnp.allclose(logits_only, ref_logits, atol=1e-5), "logits-only mismatch"

    # TODO(synk): generate() (autoregressive multinomial sampling loop) is host-side
    # control flow and is intentionally not implemented as a kernel.
    print("KERNEL_OK")
</pallas_src>

<mosaic_0001>
module attributes {stable_mosaic.version = 11 : i64} {
  func.func @kernel(%arg0: i32, %arg1: memref<16x1xi32, #tpu.memory_space<vmem>>, %arg2: memref<16x1xi32, #tpu.memory_space<vmem>>, %arg3: memref<128x128xf32, #tpu.memory_space<vmem>>, %arg4: memref<16x128xf32, #tpu.memory_space<vmem>>, %arg5: memref<8x128xf32, #tpu.memory_space<vmem>>) attributes {dimension_semantics = [#tpu.dimension_semantics<parallel>], iteration_bounds = array<i64: 1>, scalar_prefetch = 0 : i64, scratch_operands = 0 : i64, tpu.core_type = #tpu.core_type<tc>, window_params = [{transform_indices = @transform_0, window_bounds = array<i64: 16, 1>}, {transform_indices = @transform_1, window_bounds = array<i64: 16, 1>}, {pipeline_mode = #tpu.pipeline_mode<synchronous>, transform_indices = @transform_2, window_bounds = array<i64: 128, 128>}, {transform_indices = @transform_3, window_bounds = array<i64: 16, 128>}, {transform_indices = @transform_4, window_bounds = array<i64: 8, 128>}]} {
    %c0 = arith.constant 0 : index
    %c0_0 = arith.constant 0 : index
    %0 = vector.load %arg1[%c0, %c0_0] : memref<16x1xi32, #tpu.memory_space<vmem>>, vector<16x1xi32>
    %1 = tpu.iota {dimensions = array<i32: 1>} : vector<16x128xi32>
    %2 = vector.broadcast %0 : vector<16x1xi32> to vector<16x128xi32>
    %3 = arith.cmpi eq, %1, %2 : vector<16x128xi32>
    %4 = arith.extui %3 : vector<16x128xi1> to vector<16x128xi32>
    %5 = arith.sitofp %4 : vector<16x128xi32> to vector<16x128xf32>
    %c0_1 = arith.constant 0 : index
    %c0_2 = arith.constant 0 : index
    %6 = vector.load %arg3[%c0_1, %c0_2] : memref<128x128xf32, #tpu.memory_space<vmem>>, vector<128x128xf32>
    %cst = arith.constant dense<0.000000e+00> : vector<16x128xf32>
    %7 = tpu.matmul %5, %6, %cst {dimension_numbers = #tpu.dot_dimension_numbers<[1], [0], [0], [1], [0, 0, 1, 1], [], []>} : vector<16x128xf32>, vector<128x128xf32>, vector<16x128xf32> -> vector<16x128xf32>
    %c0_3 = arith.constant 0 : index
    %c0_4 = arith.constant 0 : index
    %8 = vector.load %arg4[%c0_3, %c0_4] : memref<16x128xf32, #tpu.memory_space<vmem>>, vector<16x128xf32>
    tpu.vector_store %arg4[%c0_3, %c0_4], %7 {strides = array<i32>} : memref<16x128xf32, #tpu.memory_space<vmem>>, vector<16x128xf32>,
    %c0_5 = arith.constant 0 : index
    %c0_6 = arith.constant 0 : index
    %9 = vector.load %arg2[%c0_5, %c0_6] : memref<16x1xi32, #tpu.memory_space<vmem>>, vector<16x1xi32>
    %10 = vector.broadcast %9 : vector<16x1xi32> to vector<16x128xi32>
    %11 = arith.cmpi eq, %1, %10 : vector<16x128xi32>
    %12 = arith.extui %11 : vector<16x128xi1> to vector<16x128xi32>
    %13 = arith.sitofp %12 : vector<16x128xi32> to vector<16x128xf32>
    %cst_7 = arith.constant dense<0xFF800000> : vector<16xf32>
    %14 = vector.multi_reduction <maximumf>, %7, %cst_7 [1] : vector<16x128xf32> to vector<16xf32>
    %15 = vector.shape_cast %14 : vector<16xf32> to vector<16x1xf32>
    %16 = vector.broadcast %15 : vector<16x1xf32> to vector<16x128xf32>
    %17 = arith.subf %7, %16 : vector<16x128xf32>
    %18 = math.exp %17 : vector<16x128xf32>
    %cst_8 = arith.constant dense<0.000000e+00> : vector<16xf32>
    %19 = vector.multi_reduction <add>, %18, %cst_8 [1] : vector<16x128xf32> to vector<16xf32>
    %20 = vector.shape_cast %19 : vector<16xf32> to vector<16x1xf32>
    %21 = math.log %20 : vector<16x1xf32>
    %22 = arith.addf %21, %15 : vector<16x1xf32>
    %23 = arith.mulf %7, %13 : vector<16x128xf32>
    %cst_9 = arith.constant dense<0.000000e+00> : vector<16xf32>
    %24 = vector.multi_reduction <add>, %23, %cst_9 [1] : vector<16x128xf32> to vector<16xf32>
    %25 = vector.shape_cast %24 : vector<16xf32> to vector<16x1xf32>
    %26 = arith.subf %22, %25 : vector<16x1xf32>
    %c16_i32 = arith.constant 16 : i32
    %27 = arith.muli %arg0, %c16_i32 : i32
    %28 = tpu.iota {dimensions = array<i32: 0>} : vector<16x1xi32>
    %29 = vector.broadcast %27 : i32 to vector<16x1xi32>
    %30 = arith.addi %29, %28 : vector<16x1xi32>
    %c16_i32_10 = arith.constant 16 : i32
    %31 = vector.broadcast %c16_i32_10 : i32 to vector<16x1xi32>
    %32 = arith.cmpi slt, %30, %31 : vector<16x1xi32>
    %33 = arith.extui %32 : vector<16x1xi1> to vector<16x1xi32>
    %34 = arith.sitofp %33 : vector<16x1xi32> to vector<16x1xf32>
    %35 = arith.mulf %26, %34 : vector<16x1xf32>
    %36 = vector.shape_cast %35 : vector<16x1xf32> to vector<1x16x1xf32>
    %cst_11 = arith.constant dense<0.000000e+00> : vector<1xf32>
    %37 = vector.multi_reduction <add>, %36, %cst_11 [1, 2] : vector<1x16x1xf32> to vector<1xf32>
    %38 = vector.shape_cast %37 : vector<1xf32> to vector<1x1x1xf32>
    %39 = vector.extract %38[0, 0, 0] : f32 from vector<1x1x1xf32>
    %40 = vector.broadcast %39 : f32 to vector<8x128xf32>
    %c0_12 = arith.constant 0 : index
    %c0_13 = arith.constant 0 : index
    %41 = vector.load %arg5[%c0_12, %c0_13] : memref<8x128xf32, #tpu.memory_space<vmem>>, vector<8x128xf32>
    tpu.vector_store %arg5[%c0_12, %c0_13], %40 {strides = array<i32>} : memref<8x128xf32, #tpu.memory_space<vmem>>, vector<8x128xf32>,
    return
  }
  func.func @transform_0(%arg0: i32) -> (i32, i32) {
    %c0_i32 = arith.constant 0 : i32
    %c0_i32_0 = arith.constant 0 : i32
    return %arg0, %c0_i32 : i32, i32
  }
  func.func @transform_1(%arg0: i32) -> (i32, i32) {
    %c0_i32 = arith.constant 0 : i32
    %c0_i32_0 = arith.constant 0 : i32
    return %arg0, %c0_i32 : i32, i32
  }
  func.func @transform_2(%arg0: i32) -> (i32, i32) {
    %c0_i32 = arith.constant 0 : i32
    %c0_i32_0 = arith.constant 0 : i32
    %c0_i32_1 = arith.constant 0 : i32
    return %c0_i32, %c0_i32_0 : i32, i32
  }
  func.func @transform_3(%arg0: i32) -> (i32, i32) {
    %c0_i32 = arith.constant 0 : i32
    %c0_i32_0 = arith.constant 0 : i32
    return %arg0, %c0_i32 : i32, i32
  }
  func.func @transform_4(%arg0: i32) -> (i32, i32) {
    %c0_i32 = arith.constant 0 : i32
    %c0_i32_0 = arith.constant 0 : i32
    return %arg0, %c0_i32 : i32, i32
  }
}

</mosaic_0001>

<llo_original>
// kernel: tpu_custom_call.1
$region0: #{tpu_custom_call.1}
  #allocation0 [shape = 'u32[]', space=smem, size = 0x4, offset = 0x4, fixed_abs, tag = 'smem constant byte address 0x4 - core index']
  #allocation1 [shape = 'u32[144,128]{1,0:T(1,128)}', space=vmem, size = 0x12000, scoped, tag = 'internal scratch']
  %s0 = inlined_call_operand.vmem [shape: s32[16,1], index: 0, kind: input, shape index: {}]
  %s1 = inlined_call_operand.vmem [shape: s32[16,1], index: 1, kind: input, shape index: {}]
  %s2 = inlined_call_operand.hbm [shape: f32[128,128], index: 2, kind: input, shape index: {}]
  %s3 = inlined_call_operand.hbm [shape: f32[16,128], index: 3, kind: output, shape index: {0}]
  %s4 = inlined_call_operand.hbm [shape: f32[8,128], index: 4, kind: output, shape index: {1}]
  %5 = xla_tuple %s3, %s4
  %s6 = sld [smem:[#allocation0]]
  $region34: #{tpu_custom_call.1} parent=0
    _
  %s8 = ssub.s32 1, %s6
  %s9 = scalar_select 0, %s8, %s6
  $region1: #{tpu_custom_call.1} parent=0
    #allocation2 [shape = 'u8[65536]{0}', space=vmem, size = 0x10000, scoped, tag = 'input window, operand 2, single buffered']
    #allocation3 [shape = 's32[1]{0}', space=sflag, size = 0x4, scoped, tag = 'scoped memory for tpu_custom_call.1']
    #allocation4 [shape = 's32[1]{0}', space=sflag, size = 0x4, scoped, tag = 'scoped memory for tpu_custom_call.1']
    #allocation5 [shape = 'u8[8192]{0}', space=vmem, size = 0x2000, scoped, tag = 'output window, operand 0, single buffered']
    #allocation6 [shape = 'u8[4096]{0}', space=vmem, size = 0x1000, scoped, tag = 'output window, operand 1, single buffered']
    #allocation7 [shape = 's32[1]{0}', space=sflag, size = 0x4, scoped, tag = 'scoped memory for tpu_custom_call.1']
    %10 = vsyncpa [#allocation3], 0
    %11 = vsyncpa [#allocation4], 0
    %12 = vsyncpa [#allocation7], 0
    // Predicated region
    $region2: #{tpu_custom_call.1} parent=1 // pred_check
      _
    $region3: #{tpu_custom_call.1} parent=1 // pred_check_branch
      %14 = sbr.rel (0) target = $region5
    $region4: #{tpu_custom_call.1} parent=1 // pred_region
      _
    $region5: #{tpu_custom_call.1} parent=1 // pred_fallthru
      _
    // Predicated region
    $region6: #{tpu_custom_call.1} parent=1 // pred_check
      _
    $region7: #{tpu_custom_call.1} parent=1 // pred_check_branch
      %16 = sbr.rel (0) target = $region9
    $region8: #{tpu_custom_call.1} parent=1 // pred_region
      _
    $region9: #{tpu_custom_call.1} parent=1 // pred_fallthru
      _
    // Predicated region
    $region10: #{tpu_custom_call.1} parent=1 // pred_check
      _
    $region11: #{tpu_custom_call.1} parent=1 // pred_check_branch
      %18 = sbr.rel (0) target = $region13
    $region12: #{tpu_custom_call.1} parent=1 // pred_region
      %s20 = ssub.s32 2048, 2048
      %21 = vsyncadd [#allocation3], %s20
      %s22 = sshll.u32 [#allocation2], 4
      %s23 = int_to_ptr.vmem [resolvable:$true] %s22
      %28 = dma.hbm_to_vmem [thread:$0]  %s2, 2048, %s23, [#allocation3], 128, 128, 8
    $region13: #{tpu_custom_call.1} parent=1 // pred_fallthru
      _
    // Predicated region
    $region14: #{tpu_custom_call.1} parent=1 // pred_check
      _
    $region15: #{tpu_custom_call.1} parent=1 // pred_check_branch
      %30 = sbr.rel (0) target = $region17
    $region16: #{tpu_custom_call.1} parent=1 // pred_region
      %31 = dma.done [#allocation3], 2048
    $region17: #{tpu_custom_call.1} parent=1 // pred_fallthru
      _
    %v32 = vld [vmem:[%s0] sm:$0xff]
    %v33 = vld [vmem:[%s0 + $0x8] sm:$0xff]
    %v34 = vlaneseq
    %v35 = vand.u32 %v34, 127
    %36 = vset.pattern.permute.xlu0 0
    %37 = vperm.xlu0 %36, %v32
    %v38 = vpop.permute.xlu0 %37
    %39 = vset.pattern.permute.xlu0 0
    %40 = vperm.xlu0 %39, %v33
    %v41 = vpop.permute.xlu0 %40
    %vm42 = vcmp.eq.s32.totalorder %v35, %v38
    %vm43 = vcmp.eq.s32.totalorder %v35, %v41
    %v44 = vsel %vm42, 1, 0
    %v45 = vsel %vm43, 1, 0
    %v46 = vcvt.s32.f32 %v44
    %v47 = vcvt.s32.f32 %v45
    %v48 = vld [vmem:[#allocation2] sm:$0xff]
    %v49 = vld [vmem:[#allocation2 + $0x8] sm:$0xff]
    %v50 = vld [vmem:[#allocation2 + $0x10] sm:$0xff]
    %v51 = vld [vmem:[#allocation2 + $0x18] sm:$0xff]
    %v52 = vld [vmem:[#allocation2 + $0x20] sm:$0xff]
    %v53 = vld [vmem:[#allocation2 + $0x28] sm:$0xff]
    %v54 = vld [vmem:[#allocation2 + $0x30] sm:$0xff]
    %v55 = vld [vmem:[#allocation2 + $0x38] sm:$0xff]
    %v56 = vld [vmem:[#allocation2 + $0x40] sm:$0xff]
    %v57 = vld [vmem:[#allocation2 + $0x48] sm:$0xff]
    %v58 = vld [vmem:[#allocation2 + $0x50] sm:$0xff]
    %v59 = vld [vmem:[#allocation2 + $0x58] sm:$0xff]
    %v60 = vld [vmem:[#allocation2 + $0x60] sm:$0xff]
    %v61 = vld [vmem:[#allocation2 + $0x68] sm:$0xff]
    %v62 = vld [vmem:[#allocation2 + $0x70] sm:$0xff]
    %v63 = vld [vmem:[#allocation2 + $0x78] sm:$0xff]
    %64 = vmatprep.subr.mxu0 0.0
    %65 = vmatpush1.msra.mxu0 %v48
    %66 = vmatprep.subr.mxu0 0.0
    %67 = vmatpush1.msra.mxu0 %v49
    %68 = vmatprep.subr.mxu0 0.0
    %69 = vmatpush1.msra.mxu0 %v50
    %70 = vmatprep.subr.mxu0 0.0
    %71 = vmatpush1.msra.mxu0 %v51
    %72 = vmatprep.subr.mxu0 0.0
    %73 = vmatpush1.msra.mxu0 %v52
    %74 = vmatprep.subr.mxu0 0.0
    %75 = vmatpush1.msra.mxu0 %v53
    %76 = vmatprep.subr.mxu0 0.0
    %77 = vmatpush1.msra.mxu0 %v54
    %78 = vmatprep.subr.mxu0 0.0
    %79 = vmatpush1.msra.mxu0 %v55
    %80 = vmatprep.subr.mxu0 0.0
    %81 = vmatpush1.msra.mxu0 %v56
    %82 = vmatprep.subr.mxu0 0.0
    %83 = vmatpush1.msra.mxu0 %v57
    %84 = vmatprep.subr.mxu0 0.0
    %85 = vmatpush1.msra.mxu0 %v58
    %86 = vmatprep.subr.mxu0 0.0
    %87 = vmatpush1.msra.mxu0 %v59
    %88 = vmatprep.subr.mxu0 0.0
    %89 = vmatpush1.msra.mxu0 %v60
    %90 = vmatprep.subr.mxu0 0.0
    %91 = vmatpush1.msra.mxu0 %v61
    %92 = vmatprep.subr.mxu0 0.0
    %93 = vmatpush1.msra.mxu0 %v62
    %94 = vmatprep.subr.mxu0 0.0
    %95 = vmatpush1.msra.mxu0 %v63
    %96 = vmatprep.subr.mxu0 0.0
    %97 = vmatpush1.msra.mxu0 0.0
    %98 = vmatprep.subr.mxu0 0.0
    %99 = vmatpush1.msra.mxu0 0.0
    %100 = vmatprep.subr.mxu0 0.0
    %101 = vmatpush1.msra.mxu0 0.0
    %102 = vmatprep.subr.mxu0 0.0
    %103 = vmatpush1.msra.mxu0 0.0
    %104 = vmatprep.subr.mxu0 0.0
    %105 = vmatpush1.msra.mxu0 0.0
    %106 = vmatprep.subr.mxu0 0.0
    %107 = vmatpush1.msra.mxu0 0.0
    %108 = vmatprep.subr.mxu0 0.0
    %109 = vmatpush1.msra.mxu0 0.0
    %110 = vmatprep.subr.mxu0 0.0
    %111 = vmatpush1.msra.mxu0 0.0
    %112 = vmatprep.subr.mxu0 0.0
    %113 = vmatpush1.msra.mxu0 0.0
    %114 = vmatprep.subr.mxu0 0.0
    %115 = vmatpush1.msra.mxu0 0.0
    %116 = vmatprep.subr.mxu0 0.0
    %117 = vmatpush1.msra.mxu0 0.0
    %118 = vmatprep.subr.mxu0 0.0
    %119 = vmatpush1.msra.mxu0 0.0
    %120 = vmatprep.subr.mxu0 0.0
    %121 = vmatpush1.msra.mxu0 0.0
    %122 = vmatprep.subr.mxu0 0.0
    %123 = vmatpush1.msra.mxu0 0.0
    %124 = vmatprep.subr.mxu0 0.0
    %125 = vmatpush1.msra.mxu0 0.0
    %126 = vmatprep.subr.mxu0 0.0
    %127 = vmatpush1.msra.mxu0 0.0
    %128 = vmatprep.mubr.f32.mxu0 0.0
    %129 = vmatmul.mubr.f32.gmra.mrb[0].mxu0 %v46
    %v130 = vpop.f32.mrb[0].mxu0
    %v131 = vadd.f32 0.0, %v130
    %v132 = vpop.f32.mrb[0].mxu0
    %133 = vmatprep.mubr.f32.mxu0 0.0
    %134 = vmatmul.mubr.f32.gmra.mrb[0].mxu0 %v47
    %v135 = vpop.f32.mrb[0].mxu0
    %v136 = vadd.f32 0.0, %v135
    %v137 = vpop.f32.mrb[0].mxu0
    %138 = vdwg.mxu0
    %139 = vst [vmem:[#allocation5] sm:$0xff] %v131
    %140 = vst [vmem:[#allocation5 + $0x8] sm:$0xff] %v136
    %v141 = vld [vmem:[%s1] sm:$0xff]
    %v142 = vld [vmem:[%s1 + $0x8] sm:$0xff]
    %143 = vset.pattern.permute.xlu0 0
    %144 = vperm.xlu0 %143, %v141
    %v145 = vpop.permute.xlu0 %144
    %146 = vset.pattern.permute.xlu0 0
    %147 = vperm.xlu0 %146, %v142
    %v148 = vpop.permute.xlu0 %147
    %vm149 = vcmp.eq.s32.totalorder %v35, %v145
    %vm150 = vcmp.eq.s32.totalorder %v35, %v148
    %v151 = vsel %vm149, 1, 0
    %v152 = vsel %vm150, 1, 0
    %v153 = vcvt.s32.f32 %v151
    %v154 = vcvt.s32.f32 %v152
    %155 = vmax.xlane.f32.xlu0 %v131
    %v156 = vpop.xlane.xlu0 %155
    %157 = vmax.xlane.f32.xlu0 %v136
    %v158 = vpop.xlane.xlu0 %157
    %v159 = vsub.f32 %v131, %v156
    %v160 = vsub.f32 %v136, %v158
    %v161 = vmul.f32 %v159, 1.442695
    %v162 = vpow.pop %v161
    %v163 = vmul.f32 %v160, 1.442695
    %v164 = vpow.pop %v163
    %165 = vadd.xlane.f32.xlu0 %v162
    %v166 = vpop.xlane.xlu0 %165
    %167 = vadd.xlane.f32.xlu0 %v164
    %v168 = vpop.xlane.xlu0 %167
    %v169 = vlog2.pop %v166
    %v170 = vmul.f32 %v169, 0.6931472
    %v171 = vlog2.pop %v168
    %v172 = vmul.f32 %v171, 0.6931472
    %v173 = vadd.f32 %v170, %v156
    %v174 = vadd.f32 %v172, %v158
    %v175 = vmul.f32 %v131, %v153
    %v176 = vmul.f32 %v136, %v154
    %177 = vadd.xlane.f32.xlu0 %v175
    %v178 = vpop.xlane.xlu0 %177
    %179 = vadd.xlane.f32.xlu0 %v176
    %v180 = vpop.xlane.xlu0 %179
    %v181 = vsub.f32 %v173, %v178
    %v182 = vsub.f32 %v174, %v180
    %s183 = smul.u32 0, 16
    %v184 = vlaneseq
    %v185 = vshrl.u32 %v184, 7
    %v186 = vadd.s32 %v185, 8
    %v187 = vstv %s183
    %v188 = vadd.s32 %v187, %v185
    %v189 = vadd.s32 %v187, %v186
    %vm190 = vcmp.lt.s32.totalorder %v188, 16
    %vm191 = vcmp.lt.s32.totalorder %v189, 16
    %v192 = vsel %vm190, 1, 0
    %v193 = vsel %vm191, 1, 0
    %v194 = vcvt.s32.f32 %v192
    %v195 = vcvt.s32.f32 %v193
    %v196 = vmul.f32 %v181, %v194
    %v197 = vmul.f32 %v182, %v195
    %vm198 = vcmask 7168
    %v199 = vsel %vm198, %v196, 0.0
    %v200 = vsel %vm198, %v197, 0.0
    %v201 = vadd.f32 %v199, %v200
    %202 = vadd.xlane.f32.xlu0 %v201
    %v203 = vpop.xlane.xlu0 %202
    %v204 = vrot.slane %v203, 4
    %v205 = vadd.f32 %v203, %v204
    %v206 = vrot.slane %v205, 2
    %v207 = vadd.f32 %v205, %v206
    %v208 = vrot.slane %v207, 1
    %v209 = vadd.f32 %v207, %v208
    %s210 = vtos %v209
    %v211 = vstv %s210
    %212 = vst [vmem:[#allocation6] sm:$0xff] %v211
    // Predicated region
    $region18: #{tpu_custom_call.1} parent=1 // pred_check
      _
    $region19: #{tpu_custom_call.1} parent=1 // pred_check_branch
      %214 = sbr.rel (0) target = $region21
    $region20: #{tpu_custom_call.1} parent=1 // pred_region
      %s216 = ssub.s32 256, 256
      %217 = vsyncadd [#allocation4], %s216
      %s218 = sshll.u32 [#allocation5], 4
      %s219 = int_to_ptr.vmem [resolvable:$true] %s218
      %224 = dma.vmem_to_hbm [thread:$0]  %s219, 256, %s3, [#allocation4], 128, 128, 8
    $region21: #{tpu_custom_call.1} parent=1 // pred_fallthru
      _
    // Predicated region
    $region22: #{tpu_custom_call.1} parent=1 // pred_check
      _
    $region23: #{tpu_custom_call.1} parent=1 // pred_check_branch
      %226 = sbr.rel (0) target = $region25
    $region24: #{tpu_custom_call.1} parent=1 // pred_region
      %s228 = ssub.s32 128, 128
      %229 = vsyncadd [#allocation7], %s228
      %s231 = sshll.u32 [#allocation6], 4
      %s232 = int_to_ptr.vmem [resolvable:$true] %s231
      %234 = dma.vmem_to_hbm [thread:$0]  %s232, 128, %s4, [#allocation7]
    $region25: #{tpu_custom_call.1} parent=1 // pred_fallthru
      _
    // Predicated region
    $region26: #{tpu_custom_call.1} parent=1 // pred_check
      _
    $region27: #{tpu_custom_call.1} parent=1 // pred_check_branch
      %236 = sbr.rel (0) target = $region29
    $region28: #{tpu_custom_call.1} parent=1 // pred_region
      %237 = dma.done [#allocation4], 256
    $region29: #{tpu_custom_call.1} parent=1 // pred_fallthru
      _
    // Predicated region
    $region30: #{tpu_custom_call.1} parent=1 // pred_check
      _
    $region31: #{tpu_custom_call.1} parent=1 // pred_check_branch
      %239 = sbr.rel (0) target = $region33
    $region32: #{tpu_custom_call.1} parent=1 // pred_region
      %240 = dma.done [#allocation7], 128
    $region33: #{tpu_custom_call.1} parent=1 // pred_fallthru
      _
    %241 = vsyncpa [#allocation3], 1
    %242 = vsyncpa [#allocation4], 1
    %243 = vsyncpa [#allocation7], 1

</llo_original>
